<compile_context>
chip_gen: v5e
topology: v5e:2x2
jax: 0.10.0
libtpu: 0.0.40
codegen_flags: <defaults>
</compile_context>

<pallas_src>
import functools

import numpy as np
import jax
import jax.numpy as jnp
from jax import lax
from jax.experimental import pallas as pl
from jax.experimental.pallas import tpu as pltpu

NUM_PARTS = 50

IDX2PIDS = {
    0: [0, 1, 2, 3], 1: [4, 5], 2: [6, 7], 3: [8, 9, 10, 11],
    4: [12, 13, 14, 15], 5: [16, 17, 18], 6: [19, 20, 21], 7: [22, 23],
    8: [24, 25, 26, 27], 9: [28, 29], 10: [30, 31, 32, 33, 34, 35],
    11: [36, 37], 12: [38, 39, 40], 13: [41, 42, 43], 14: [44, 45, 46],
    15: [47, 48, 49],
}


def _miou_kernel(cls_ref, logits_ref, targets_ref, p2c_ref, invw_ref,
                 iou_ref, pred_ref, *, bt):
    """One grid step == `bt` samples: masked argmax + per-part IoU (MXU counts)."""
    step = pl.program_id(0)
    _, P, n = logits_ref.shape

    logit = logits_ref[...]          # (bt, P, n) native dtype (bf16 stays bf16)
    tgt = targets_ref[...]           # (bt, 1, n) int32
    p2c = p2c_ref[...]               # (P, 1) int32   part -> shape class id
    invw = invw_ref[...]             # (P, 1) f32     1 / len(pids of that class)

    # Per-sample part weights from the class label (SMEM scalar prefetch):
    #   w[b, p] = 1/len(pids(cls_b)) if part p belongs to class cls_b else 0
    rows = []
    for b in range(bt):              # static unroll, bt <= 8
        cls_b = cls_ref[step * bt + b]
        rows.append(jnp.where(p2c == cls_b, invw, 0.0))        # (P, 1)
    w = jnp.stack(rows, axis=0)      # (bt, P, 1) f32
    allowed = w > 0.0                # (bt, P, 1) bool

    part_ids = lax.broadcasted_iota(jnp.int32, (1, P, n), 1)   # (1, P, n)

    # Masked argmax over the part axis in the logits' native dtype
    # (min index among maxima == first-max, matching torch/np argmax).
    # NOTE: if an allowed logit were exactly -inf, a disallowed row could tie;
    # fine for finite inputs, same caveat as the reference kernel.
    masked = jnp.where(allowed, logit, -jnp.inf)               # (bt, P, n)
    maxv = jnp.max(masked, axis=1, keepdims=True)              # (bt, 1, n)
    is_max = masked == maxv
    pred = jnp.min(jnp.where(is_max, part_ids, NUM_PARTS),
                   axis=1, keepdims=True)                      # (bt, 1, n) int32
    # TODO(synk): pred could be stored as int8 (values 0..49) to shave ~2% of the
    # HBM writeback; kept int32 to mirror the torch int64 prediction output.
    pred_ref[...] = pred

    # Per-part counts over points, offloaded to the MXU:
    #   inter[p] = |pred==p & gt==p| ; cnt[p] = |pred==p| + |gt==p|
    # Masks are exact 0/1(/2) in bf16 and accumulate in f32 -> exact counts
    # (exact up to 2^24 points per part, fine at ShapeNet sizes).
    pred_eq = pred == part_ids                                 # (bt, P, n) bool
    gt_eq = tgt == part_ids                                    # (bt, P, n) bool
    inter_m = (pred_eq & gt_eq).astype(jnp.bfloat16)
    cnt_m = pred_eq.astype(jnp.bfloat16) + gt_eq.astype(jnp.bfloat16)
    ones = jnp.ones((bt, n, 128), jnp.bfloat16)                # splat constant (free)
    dn = (((2,), (1,)), ((0,), (0,)))                          # contract n, batch bt
    inter = lax.dot_general(inter_m, ones, dn,
                            preferred_element_type=jnp.float32)[..., 0:1]  # (bt,P,1)
    cnt = lax.dot_general(cnt_m, ones, dn,
                          preferred_element_type=jnp.float32)[..., 0:1]    # (bt,P,1)

    union = cnt - inter
    iou_p = jnp.where(union == 0.0, 1.0, inter / jnp.maximum(union, 1.0))  # (bt,P,1)
    # weight already folds in 1/len(pids) and zeroes parts outside the class
    iou_ref[...] = jnp.sum(iou_p * w, axis=1, keepdims=True)   # (bt, 1, 1)
    # TODO(synk): for very large N the (bt, P, n) elementwise chain exceeds the
    # 64-vreg file and streams through VMEM; a fori_loop over ~1024-lane chunks
    # with (P,1) accumulators would keep it in-register (v7x/v6e compute regime).


def _pick_block_batch(B):
    """Largest Bt <= 8 dividing B, preferring an even number of grid steps so
    both v7x TensorCores get equal work along the parallel batch axis."""
    divs = [d for d in range(1, min(B, 8) + 1) if B % d == 0]
    even = [d for d in divs if (B // d) % 2 == 0]
    return max(even) if even else max(divs)


def miou_forward(logits, targets, class_labels):
    """logits [B, 50, N] float, targets [B, N] int, class_labels [B] int
    -> (scalar mean IoU f32, masked predictions [B, N] int32)."""
    B, C, N = logits.shape
    assert C == NUM_PARTS
    bt = _pick_block_batch(B)
    steps = B // bt

    # tiny resident tables: part -> class id, and 1/len(pids of that class)
    p2c_np = np.zeros((NUM_PARTS, 1), np.int32)
    invw_np = np.zeros((NUM_PARTS, 1), np.float32)
    for c, pids in IDX2PIDS.items():
        for p in pids:
            p2c_np[p, 0] = c
            invw_np[p, 0] = 1.0 / len(pids)
    p2c = jnp.asarray(p2c_np)
    invw = jnp.asarray(invw_np)

    targets = targets.astype(jnp.int32).reshape(B, 1, N)
    class_labels = class_labels.astype(jnp.int32)

    grid_spec = pltpu.PrefetchScalarGridSpec(
        num_scalar_prefetch=1,
        grid=(steps,),
        in_specs=[
            # full-extent last-two dims: legal for any N, no HBM padding needed
            pl.BlockSpec((bt, NUM_PARTS, N), lambda i, cls: (i, 0, 0)),
            pl.BlockSpec((bt, 1, N), lambda i, cls: (i, 0, 0)),
            pl.BlockSpec((NUM_PARTS, 1), lambda i, cls: (0, 0)),   # resident table
            pl.BlockSpec((NUM_PARTS, 1), lambda i, cls: (0, 0)),   # resident table
        ],
        out_specs=(
            pl.BlockSpec((bt, 1, 1), lambda i, cls: (i, 0, 0)),
            pl.BlockSpec((bt, 1, N), lambda i, cls: (i, 0, 0)),
        ),
    )

    # double-buffered per-step footprint -> explicit scoped-VMEM limit with headroom
    in_bytes = bt * NUM_PARTS * N * np.dtype(logits.dtype).itemsize + bt * N * 4
    out_bytes = bt * N * 4 + bt * 4
    step_bytes = 2 * (in_bytes + out_bytes)
    vmem_limit = int(min(64 * 2**20, max(32 * 2**20, 3 * step_bytes)))

    iou_b, pred = pl.pallas_call(
        functools.partial(_miou_kernel, bt=bt),
        grid_spec=grid_spec,
        out_shape=(
            jax.ShapeDtypeStruct((B, 1, 1), jnp.float32),
            jax.ShapeDtypeStruct((B, 1, N), jnp.int32),  # torch returns int64; int32 here
        ),
        compiler_params=pltpu.CompilerParams(
            dimension_semantics=("parallel",),
            vmem_limit_bytes=vmem_limit,
        ),
    )(class_labels, logits, targets, p2c, invw)

    return jnp.mean(iou_b.reshape(B)), pred.reshape(B, N)


def miou_reference(logits_f32, targets, class_labels):
    """Pure numpy re-implementation of the PyTorch forward, for verification."""
    logits_np = np.asarray(logits_f32, dtype=np.float32)
    targets_np = np.asarray(targets)
    cls = np.asarray(class_labels)
    B, _, N = logits_np.shape
    batch_iou = np.zeros(B, np.float64)
    pred_out = np.zeros((B, N), np.int64)
    for i in range(B):
        pids = IDX2PIDS[int(cls[i])]
        masked = np.full_like(logits_np[i], -np.inf)
        masked[pids, :] = logits_np[i][pids, :]
        pred = masked.argmax(axis=0)
        pred_out[i] = pred
        for pid in pids:
            pp = pred == pid
            gp = targets_np[i] == pid
            union = np.logical_or(pp, gp).sum()
            inter = np.logical_and(pp, gp).sum()
            batch_iou[i] += 1.0 if union == 0 else inter / union
        batch_iou[i] /= len(pids)
    return batch_iou.mean(), pred_out


if __name__ == "__main__":
    key = jax.random.PRNGKey(0)
    # configs exercise: unaligned N (no-pad path), aligned N, bf16-native argmax
    # with bt=2 batched grid steps, and bt=4 batching with even step count.
    configs = [(2, 200, jnp.float32), (2, 128, jnp.float32),
               (4, 250, jnp.bfloat16), (8, 384, jnp.float32)]
    for B, N, dt in configs:
        k1, k2, k3, key = jax.random.split(key, 4)
        logits = jax.random.normal(k1, (B, NUM_PARTS, N), jnp.float32).astype(dt)
        class_labels = jax.random.randint(k2, (B,), 0, len(IDX2PIDS), jnp.int32)
        targets = jax.random.randint(k3, (B, N), 0, NUM_PARTS, jnp.int32)

        iou, pred = miou_forward(logits, targets, class_labels)
        jax.block_until_ready((iou, pred))

        ref_iou, ref_pred = miou_reference(logits.astype(jnp.float32), targets, class_labels)
        assert np.allclose(float(iou), ref_iou, rtol=1e-5, atol=1e-5), (float(iou), ref_iou)
        assert np.array_equal(np.asarray(pred, dtype=np.int64), ref_pred)
    # TODO(synk): stateful epoch accumulation (iou_sum/total/history, compute_epoch,
    # reset) is host-side bookkeeping in the nn.Module and is intentionally left out.
    print("KERNEL_OK")
</pallas_src>

<mosaic_0001>
module attributes {stable_mosaic.version = 11 : i64} {
  func.func @_miou_kernel(%arg0: i32, %arg1: memref<2xi32, #tpu.memory_space<smem>>, %arg2: memref<1x50x200xf32, #tpu.memory_space<vmem>>, %arg3: memref<1x1x200xi32, #tpu.memory_space<vmem>>, %arg4: memref<50x1xi32, #tpu.memory_space<vmem>>, %arg5: memref<50x1xf32, #tpu.memory_space<vmem>>, %arg6: memref<1x1x1xf32, #tpu.memory_space<vmem>>, %arg7: memref<1x1x200xi32, #tpu.memory_space<vmem>>) attributes {dimension_semantics = [#tpu.dimension_semantics<parallel>], iteration_bounds = array<i64: 2>, scalar_prefetch = 1 : i64, scratch_operands = 0 : i64, tpu.core_type = #tpu.core_type<tc>, window_params = [{transform_indices = @transform_0, window_bounds = array<i64: 1, 50, 200>}, {transform_indices = @transform_1, window_bounds = array<i64: 1, 1, 200>}, {pipeline_mode = #tpu.pipeline_mode<synchronous>, transform_indices = @transform_2, window_bounds = array<i64: 50, 1>}, {pipeline_mode = #tpu.pipeline_mode<synchronous>, transform_indices = @transform_3, window_bounds = array<i64: 50, 1>}, {transform_indices = @transform_4, window_bounds = array<i64: 1, 1, 1>}, {transform_indices = @transform_5, window_bounds = array<i64: 1, 1, 200>}]} {
    %c0 = arith.constant 0 : index
    %c0_0 = arith.constant 0 : index
    %c0_1 = arith.constant 0 : index
    %0 = vector.load %arg2[%c0, %c0_0, %c0_1] : memref<1x50x200xf32, #tpu.memory_space<vmem>>, vector<1x50x200xf32>
    %c0_2 = arith.constant 0 : index
    %c0_3 = arith.constant 0 : index
    %c0_4 = arith.constant 0 : index
    %1 = vector.load %arg3[%c0_2, %c0_3, %c0_4] : memref<1x1x200xi32, #tpu.memory_space<vmem>>, vector<1x1x200xi32>
    %c0_5 = arith.constant 0 : index
    %c0_6 = arith.constant 0 : index
    %2 = vector.load %arg4[%c0_5, %c0_6] : memref<50x1xi32, #tpu.memory_space<vmem>>, vector<50x1xi32>
    %c0_7 = arith.constant 0 : index
    %c0_8 = arith.constant 0 : index
    %3 = vector.load %arg5[%c0_7, %c0_8] : memref<50x1xf32, #tpu.memory_space<vmem>>, vector<50x1xf32>
    %c1_i32 = arith.constant 1 : i32
    %4 = arith.muli %arg0, %c1_i32 : i32
    %c0_i32 = arith.constant 0 : i32
    %5 = arith.addi %4, %c0_i32 : i32
    %6 = arith.index_cast %5 : i32 to index
    %7 = memref.load %arg1[%6] : memref<2xi32, #tpu.memory_space<smem>>
    %8 = vector.broadcast %7 : i32 to vector<50x1xi32>
    %9 = arith.cmpi eq, %2, %8 : vector<50x1xi32>
    %cst = arith.constant 0.000000e+00 : f32
    %10 = vector.broadcast %cst : f32 to vector<50x1xf32>
    %11 = arith.select %9, %3, %10 : vector<50x1xi1>, vector<50x1xf32>
    %12 = vector.shape_cast %11 : vector<50x1xf32> to vector<1x50x1xf32>
    %cst_9 = arith.constant 0.000000e+00 : f32
    %13 = vector.broadcast %cst_9 : f32 to vector<1x50x1xf32>
    %14 = arith.cmpf ogt, %12, %13 : vector<1x50x1xf32>
    %15 = tpu.iota {dimensions = array<i32: 1>} : vector<1x50x200xi32>
    %cst_10 = arith.constant 0xFF800000 : f32
    %16 = vector.shape_cast %14 : vector<1x50x1xi1> to vector<1x50x1xi1>
    %17 = vector.broadcast %16 : vector<1x50x1xi1> to vector<1x50x200xi1>
    %18 = vector.broadcast %cst_10 : f32 to vector<1x50x200xf32>
    %19 = arith.select %17, %0, %18 : vector<1x50x200xi1>, vector<1x50x200xf32>
    %cst_11 = arith.constant dense<0xFF800000> : vector<1x200xf32>
    %20 = vector.multi_reduction <maximumf>, %19, %cst_11 [1] : vector<1x50x200xf32> to vector<1x200xf32>
    %21 = vector.shape_cast %20 : vector<1x200xf32> to vector<1x1x200xf32>
    %22 = vector.broadcast %21 : vector<1x1x200xf32> to vector<1x50x200xf32>
    %23 = arith.cmpf oeq, %19, %22 : vector<1x50x200xf32>
    %c50_i32 = arith.constant 50 : i32
    %24 = vector.broadcast %c50_i32 : i32 to vector<1x50x200xi32>
    %25 = arith.select %23, %15, %24 : vector<1x50x200xi1>, vector<1x50x200xi32>
    %cst_12 = arith.constant dense<2147483647> : vector<1x200xi32>
    %26 = vector.multi_reduction <minsi>, %25, %cst_12 [1] : vector<1x50x200xi32> to vector<1x200xi32>
    %27 = vector.shape_cast %26 : vector<1x200xi32> to vector<1x1x200xi32>
    %c0_13 = arith.constant 0 : index
    %c0_14 = arith.constant 0 : index
    %c0_15 = arith.constant 0 : index
    %28 = vector.load %arg7[%c0_13, %c0_14, %c0_15] : memref<1x1x200xi32, #tpu.memory_space<vmem>>, vector<1x1x200xi32>
    tpu.vector_store %arg7[%c0_13, %c0_14, %c0_15], %27 {strides = array<i32>} : memref<1x1x200xi32, #tpu.memory_space<vmem>>, vector<1x1x200xi32>,
    %29 = vector.broadcast %27 : vector<1x1x200xi32> to vector<1x50x200xi32>
    %30 = arith.cmpi eq, %29, %15 : vector<1x50x200xi32>
    %31 = vector.broadcast %1 : vector<1x1x200xi32> to vector<1x50x200xi32>
    %32 = arith.cmpi eq, %31, %15 : vector<1x50x200xi32>
    %33 = arith.andi %30, %32 : vector<1x50x200xi1>
    %34 = arith.extui %33 : vector<1x50x200xi1> to vector<1x50x200xi32>
    %35 = arith.sitofp %34 : vector<1x50x200xi32> to vector<1x50x200xf32>
    %36 = arith.truncf %35 : vector<1x50x200xf32> to vector<1x50x200xbf16>
    %37 = arith.extui %30 : vector<1x50x200xi1> to vector<1x50x200xi32>
    %38 = arith.sitofp %37 : vector<1x50x200xi32> to vector<1x50x200xf32>
    %39 = arith.truncf %38 : vector<1x50x200xf32> to vector<1x50x200xbf16>
    %40 = arith.extui %32 : vector<1x50x200xi1> to vector<1x50x200xi32>
    %41 = arith.sitofp %40 : vector<1x50x200xi32> to vector<1x50x200xf32>
    %42 = arith.truncf %41 : vector<1x50x200xf32> to vector<1x50x200xbf16>
    %43 = arith.addf %39, %42 : vector<1x50x200xbf16>
    %cst_16 = arith.constant 1.000000e+00 : bf16
    %44 = vector.broadcast %cst_16 : bf16 to vector<1x200x128xbf16>
    %cst_17 = arith.constant dense<0.000000e+00> : vector<1x50x128xf32>
    %45 = tpu.matmul %36, %44, %cst_17 {dimension_numbers = #tpu.dot_dimension_numbers<[2], [1], [1], [2], [0, 0, 0, 1, 1, 2], [0], [0]>} : vector<1x50x200xbf16>, vector<1x200x128xbf16>, vector<1x50x128xf32> -> vector<1x50x128xf32>
    %46 = vector.extract_strided_slice %45 {offsets = [0, 0, 0], sizes = [1, 50, 1], strides = [1, 1, 1]} : vector<1x50x128xf32> to vector<1x50x1xf32>
    %cst_18 = arith.constant dense<0.000000e+00> : vector<1x50x128xf32>
    %47 = tpu.matmul %43, %44, %cst_18 {dimension_numbers = #tpu.dot_dimension_numbers<[2], [1], [1], [2], [0, 0, 0, 1, 1, 2], [0], [0]>} : vector<1x50x200xbf16>, vector<1x200x128xbf16>, vector<1x50x128xf32> -> vector<1x50x128xf32>
    %48 = vector.extract_strided_slice %47 {offsets = [0, 0, 0], sizes = [1, 50, 1], strides = [1, 1, 1]} : vector<1x50x128xf32> to vector<1x50x1xf32>
    %49 = arith.subf %48, %46 : vector<1x50x1xf32>
    %cst_19 = arith.constant 0.000000e+00 : f32
    %50 = vector.broadcast %cst_19 : f32 to vector<1x50x1xf32>
    %51 = arith.cmpf oeq, %49, %50 : vector<1x50x1xf32>
    %cst_20 = arith.constant 1.000000e+00 : f32
    %52 = vector.broadcast %cst_20 : f32 to vector<1x50x1xf32>
    %53 = arith.maximumf %49, %52 : vector<1x50x1xf32>
    %54 = arith.divf %46, %53 : vector<1x50x1xf32>
    %cst_21 = arith.constant 1.000000e+00 : f32
    %55 = vector.broadcast %cst_21 : f32 to vector<1x50x1xf32>
    %56 = arith.select %51, %55, %54 : vector<1x50x1xi1>, vector<1x50x1xf32>
    %57 = arith.mulf %56, %12 : vector<1x50x1xf32>
    %cst_22 = arith.constant dense<0.000000e+00> : vector<1x1xf32>
    %58 = vector.multi_reduction <add>, %57, %cst_22 [1] : vector<1x50x1xf32> to vector<1x1xf32>
    %59 = vector.shape_cast %58 : vector<1x1xf32> to vector<1x1x1xf32>
    %c0_23 = arith.constant 0 : index
    %c0_24 = arith.constant 0 : index
    %c0_25 = arith.constant 0 : index
    %60 = vector.load %arg6[%c0_23, %c0_24, %c0_25] : memref<1x1x1xf32, #tpu.memory_space<vmem>>, vector<1x1x1xf32>
    tpu.vector_store %arg6[%c0_23, %c0_24, %c0_25], %59 {strides = array<i32>} : memref<1x1x1xf32, #tpu.memory_space<vmem>>, vector<1x1x1xf32>,
    return
  }
  func.func @transform_0(%arg0: i32, %arg1: memref<2xi32, #tpu.memory_space<smem>>) -> (i32, i32, i32) {
    %c0_i32 = arith.constant 0 : i32
    %c0_i32_0 = arith.constant 0 : i32
    %c0_i32_1 = arith.constant 0 : i32
    return %arg0, %c0_i32, %c0_i32_0 : i32, i32, i32
  }
  func.func @transform_1(%arg0: i32, %arg1: memref<2xi32, #tpu.memory_space<smem>>) -> (i32, i32, i32) {
    %c0_i32 = arith.constant 0 : i32
    %c0_i32_0 = arith.constant 0 : i32
    %c0_i32_1 = arith.constant 0 : i32
    return %arg0, %c0_i32, %c0_i32_0 : i32, i32, i32
  }
  func.func @transform_2(%arg0: i32, %arg1: memref<2xi32, #tpu.memory_space<smem>>) -> (i32, i32) {
    %c0_i32 = arith.constant 0 : i32
    %c0_i32_0 = arith.constant 0 : i32
    %c0_i32_1 = arith.constant 0 : i32
    return %c0_i32, %c0_i32_0 : i32, i32
  }
  func.func @transform_3(%arg0: i32, %arg1: memref<2xi32, #tpu.memory_space<smem>>) -> (i32, i32) {
    %c0_i32 = arith.constant 0 : i32
    %c0_i32_0 = arith.constant 0 : i32
    %c0_i32_1 = arith.constant 0 : i32
    return %c0_i32, %c0_i32_0 : i32, i32
  }
  func.func @transform_4(%arg0: i32, %arg1: memref<2xi32, #tpu.memory_space<smem>>) -> (i32, i32, i32) {
    %c0_i32 = arith.constant 0 : i32
    %c0_i32_0 = arith.constant 0 : i32
    %c0_i32_1 = arith.constant 0 : i32
    return %arg0, %c0_i32, %c0_i32_0 : i32, i32, i32
  }
  func.func @transform_5(%arg0: i32, %arg1: memref<2xi32, #tpu.memory_space<smem>>) -> (i32, i32, i32) {
    %c0_i32 = arith.constant 0 : i32
    %c0_i32_0 = arith.constant 0 : i32
    %c0_i32_1 = arith.constant 0 : i32
    return %arg0, %c0_i32, %c0_i32_0 : i32, i32, i32
  }
}

</mosaic_0001>

<llo_original>
// kernel: tpu_custom_call.1
$region0: #{tpu_custom_call.1}
  #allocation0 [shape = 'u32[]', space=smem, size = 0x4, offset = 0x4, fixed_abs, tag = 'smem constant byte address 0x4 - core index']
  #allocation1 [shape = 'u32[72,128]{1,0:T(1,128)}', space=vmem, size = 0x9000, scoped, tag = 'internal scratch']
  #allocation2 [shape = 's32[1]{0}', space=sflag, size = 0x4, scoped, tag = 'scoped memory for tpu_custom_call.1']
  #allocation3 [shape = 'u8[512]{0}', space=smem, size = 0x200, scoped, tag = 'prefetched SMEM operand 0']
  %s0 = inlined_call_operand.vmem [shape: s32[2], index: 0, kind: input, shape index: {}]
  %s1 = inlined_call_operand.vmem [shape: f32[2,50,200], index: 1, kind: input, shape index: {}]
  %s2 = inlined_call_operand.vmem [shape: s32[2,1,200], index: 2, kind: input, shape index: {}]
  %s3 = inlined_call_operand.vmem [shape: s32[50,1], index: 3, kind: input, shape index: {}]
  %s4 = inlined_call_operand.vmem [shape: f32[50,1], index: 4, kind: input, shape index: {}]
  %s5 = inlined_call_operand.vmem [shape: f32[2,1,1], index: 5, kind: output, shape index: {0}]
  %s6 = inlined_call_operand.hbm [shape: s32[2,1,200], index: 6, kind: output, shape index: {1}]
  %7 = xla_tuple %s5, %s6
  %s8 = sld [smem:[#allocation0]]
  $region57: #{tpu_custom_call.1} parent=0
    _
  %s10 = ssub.s32 1, %s8
  %s11 = scalar_select 0, %s10, %s8
  %s13 = sshll.u32 %s0, 4
  %s14 = int_to_ptr.vmem [resolvable:$true] %s13
  %16 = dma.vmem_to_smem %s14, 16, [#allocation3], [#allocation2]
  %18 = dma.done [#allocation2], 16
  %19 = sfence
  $region1: #{tpu_custom_call.1} parent=0
    #allocation4 [shape = 'u8[2048]{0}', space=vmem, size = 0x800, scoped, tag = 'output window, operand 1']
    #allocation5 [shape = 's32[2]{0}', space=sflag, size = 0x8, scoped, tag = 'scoped memory for tpu_custom_call.1']
    %20 = vsyncpa [#allocation5], 0
    %s21 = scalar_lea.sflag [#allocation5], 1
    %22 = vsyncpa %s21, 0
    loop: start=0, step=1, limit=4
    $region2: #{tpu_custom_call.1} parent=1 // loop_pre_header
      _
    $region3: #{tpu_custom_call.1} parent=1 // loop_header
      %s24 = sphi 0, %s28
      %p25 = scmp.ge.s32.totalorder %s24, 4
      %s34 = sphi 0, %s36
      %s37 = sphi 0, %s34
      %s38 = sphi 0, %s37
      %s54 = sphi 0, %s38
      %s60 = sphi 0, %s62
      %s63 = sphi 0, %s60
      %s64 = sphi 0, %s63
      %s80 = sphi 0, %s64
      %s84 = sphi 0, %s84
      %s86 = sphi 0, %s84
      %s87 = sphi 0, %s86
      %s101 = sphi 0, %s87
      %s105 = sphi 0, %s105
      %s107 = sphi 0, %s105
      %s108 = sphi 0, %s107
      %s122 = sphi 0, %s108
      %s128 = sphi 0, %s130
      %s131 = sphi 0, %s128
      %s132 = sphi 0, %s131
      %s148 = sphi 0, %s132
      %s154 = sphi 0, %s156
      %s157 = sphi 0, %s154
      %s158 = sphi 0, %s157
      %s174 = sphi 0, %s158
    $region4: #{tpu_custom_call.1} parent=1 // loop_header_branch
      %27 = sbr.rel (%p25) target = $region8
    $region5: #{tpu_custom_call.1} parent=1 // loop_body
      %s29 = ssub.s32 %s24, 1
      %s30 = ssub.s32 %s24, 2
      %s31 = sadd.s32 %s24, 1
      %s32 = ssub.s32 %s24, %s31
      %p33 = scmp.eq.s32.totalorder %s32, 0
      %s35 = sadd.s32 %s34, 1
      %s36 = scalar_select %p33, %s34, %s35
      %p39 = pneg %p33
      %p40 = scmp.eq.s32.totalorder %s24, 1
      %p41 = por %p39, %p40
      %p42 = scmp.ne.s32.totalorder %s34, %s37
      %p43 = scmp.eq.s32.totalorder %s24, 0
      %p44 = por %p42, %p43
      %p45 = scmp.ne.s32.totalorder %s34, %s37
      %p46 = scmp.eq.s32.totalorder %s29, 1
      %p47 = por %p45, %p46
      %p48 = scmp.ne.s32.totalorder %s37, %s38
      %p49 = scmp.eq.s32.totalorder %s29, 0
      %p50 = por %p48, %p49
      %p51 = scmp.ne.s32.totalorder %s37, %s38
      %p52 = scmp.eq.s32.totalorder %s30, 1
      %p53 = por %p51, %p52
      %p55 = scmp.ne.s32.totalorder %s38, %s54
      %p56 = scmp.eq.s32.totalorder %s30, 0
      %p57 = por %p55, %p56
      %s58 = ssub.s32 %s24, %s31
      %p59 = scmp.eq.s32.totalorder %s58, 0
      %s61 = sadd.s32 %s60, 1
      %s62 = scalar_select %p59, %s60, %s61
      %p65 = pneg %p59
      %p66 = scmp.eq.s32.totalorder %s24, 1
      %p67 = por %p65, %p66
      %p68 = scmp.ne.s32.totalorder %s60, %s63
      %p69 = scmp.eq.s32.totalorder %s24, 0
      %p70 = por %p68, %p69
      %p71 = scmp.ne.s32.totalorder %s60, %s63
      %p72 = scmp.eq.s32.totalorder %s29, 1
      %p73 = por %p71, %p72
      %p74 = scmp.ne.s32.totalorder %s63, %s64
      %p75 = scmp.eq.s32.totalorder %s29, 0
      %p76 = por %p74, %p75
      %p77 = scmp.ne.s32.totalorder %s63, %s64
      %p78 = scmp.eq.s32.totalorder %s30, 1
      %p79 = por %p77, %p78
      %p81 = scmp.ne.s32.totalorder %s64, %s80
      %p82 = scmp.eq.s32.totalorder %s30, 0
      %p83 = por %p81, %p82
      %s85 = sadd.s32 %s84, 1
      %p88 = scmp.eq.s32.totalorder %s24, 1
      %p89 = scmp.ne.s32.totalorder %s84, %s86
      %p90 = scmp.eq.s32.totalorder %s24, 0
      %p91 = por %p89, %p90
      %p92 = scmp.ne.s32.totalorder %s84, %s86
      %p93 = scmp.eq.s32.totalorder %s29, 1
      %p94 = por %p92, %p93
      %p95 = scmp.ne.s32.totalorder %s86, %s87
      %p96 = scmp.eq.s32.totalorder %s29, 0
      %p97 = por %p95, %p96
      %p98 = scmp.ne.s32.totalorder %s86, %s87
      %p99 = scmp.eq.s32.totalorder %s30, 1
      %p100 = por %p98, %p99
      %p102 = scmp.ne.s32.totalorder %s87, %s101
      %p103 = scmp.eq.s32.totalorder %s30, 0
      %p104 = por %p102, %p103
      %s106 = sadd.s32 %s105, 1
      %p109 = scmp.eq.s32.totalorder %s24, 1
      %p110 = scmp.ne.s32.totalorder %s105, %s107
      %p111 = scmp.eq.s32.totalorder %s24, 0
      %p112 = por %p110, %p111
      %p113 = scmp.ne.s32.totalorder %s105, %s107
      %p114 = scmp.eq.s32.totalorder %s29, 1
      %p115 = por %p113, %p114
      %p116 = scmp.ne.s32.totalorder %s107, %s108
      %p117 = scmp.eq.s32.totalorder %s29, 0
      %p118 = por %p116, %p117
      %p119 = scmp.ne.s32.totalorder %s107, %s108
      %p120 = scmp.eq.s32.totalorder %s30, 1
      %p121 = por %p119, %p120
      %p123 = scmp.ne.s32.totalorder %s108, %s122
      %p124 = scmp.eq.s32.totalorder %s30, 0
      %p125 = por %p123, %p124
      %s126 = ssub.s32 %s24, %s31
      %p127 = scmp.eq.s32.totalorder %s126, 0
      %s129 = sadd.s32 %s128, 1
      %s130 = scalar_select %p127, %s128, %s129
      %p133 = pneg %p127
      %p134 = scmp.eq.s32.totalorder %s24, 1
      %p135 = por %p133, %p134
      %p136 = scmp.ne.s32.totalorder %s128, %s131
      %p137 = scmp.eq.s32.totalorder %s24, 0
      %p138 = por %p136, %p137
      %p139 = scmp.ne.s32.totalorder %s128, %s131
      %p140 = scmp.eq.s32.totalorder %s29, 1
      %p141 = por %p139, %p140
      %p142 = scmp.ne.s32.totalorder %s131, %s132
      %p143 = scmp.eq.s32.totalorder %s29, 0
      %p144 = por %p142, %p143
      %p145 = scmp.ne.s32.totalorder %s131, %s132
      %p146 = scmp.eq.s32.totalorder %s30, 1
      %p147 = por %p145, %p146
      %p149 = scmp.ne.s32.totalorder %s132, %s148
      %p150 = scmp.eq.s32.totalorder %s30, 0
      %p151 = por %p149, %p150
      %s152 = ssub.s32 %s24, %s31
      %p153 = scmp.eq.s32.totalorder %s152, 0
      %s155 = sadd.s32 %s154, 1
      %s156 = scalar_select %p153, %s154, %s155
      %p159 = pneg %p153
      %p160 = scmp.eq.s32.totalorder %s24, 1
      %p161 = por %p159, %p160
      %p162 = scmp.ne.s32.totalorder %s154, %s157
      %p163 = scmp.eq.s32.totalorder %s24, 0
      %p164 = por %p162, %p163
      %p165 = scmp.ne.s32.totalorder %s154, %s157
      %p166 = scmp.eq.s32.totalorder %s29, 1
      %p167 = por %p165, %p166
      %p168 = scmp.ne.s32.totalorder %s157, %s158
      %p169 = scmp.eq.s32.totalorder %s29, 0
      %p170 = por %p168, %p169
      %p171 = scmp.ne.s32.totalorder %s157, %s158
      %p172 = scmp.eq.s32.totalorder %s30, 1
      %p173 = por %p171, %p172
      %p175 = scmp.ne.s32.totalorder %s158, %s174
      %p176 = scmp.eq.s32.totalorder %s30, 0
      %p177 = por %p175, %p176
      %p178 = scmp.le.s32.totalorder 1, %s24
      %p179 = scmp.lt.s32.totalorder %s24, 3
      %p180 = pnand %p178, %p179
      %p181 = pneg %p180
      // Predicated region
      $region9: #{tpu_custom_call.1} parent=5 // pred_check
        _
      $region10: #{tpu_custom_call.1} parent=5 // pred_check_branch
        %183 = sbr.rel (%p180) target = $region12
      $region11: #{tpu_custom_call.1} parent=5 // pred_region
        %s184 = ssub.s32 %s24, 1
        // Predicated region
        $region13: #{tpu_custom_call.1} parent=11 // pred_check
          %p185 = pneg %p97
        $region14: #{tpu_custom_call.1} parent=11 // pred_check_branch
          %187 = sbr.rel (%p185) target = $region16
        $region15: #{tpu_custom_call.1} parent=11 // pred_region
          _
        $region16: #{tpu_custom_call.1} parent=11 // pred_fallthru
          _
        // Predicated region
        $region17: #{tpu_custom_call.1} parent=11 // pred_check
          %p188 = pneg %p118
        $region18: #{tpu_custom_call.1} parent=11 // pred_check_branch
          %190 = sbr.rel (%p188) target = $region20
        $region19: #{tpu_custom_call.1} parent=11 // pred_region
          _
        $region20: #{tpu_custom_call.1} parent=11 // pred_fallthru
          _
      $region12: #{tpu_custom_call.1} parent=5 // pred_fallthru
        _
      %p191 = scmp.lt.s32.totalorder %s24, 2
      // Predicated region
      $region21: #{tpu_custom_call.1} parent=5 // pred_check
        %p192 = pneg %p191
      $region22: #{tpu_custom_call.1} parent=5 // pred_check_branch
        %194 = sbr.rel (%p192) target = $region24
      $region23: #{tpu_custom_call.1} parent=5 // pred_region
        // Predicated region
        $region25: #{tpu_custom_call.1} parent=23 // pred_check
          %p195 = pneg %p44
        $region26: #{tpu_custom_call.1} parent=23 // pred_check_branch
          %197 = sbr.rel (%p195) target = $region28
        $region27: #{tpu_custom_call.1} parent=23 // pred_region
          %p198 = scmp.lt.s32.totalorder %s24, 1
          %s199 = scalar_select %p198, %s24, 1
          %s200 = smul.addr %s199, 14
          %s201 = smul.addr %s200, 8
          %s202 = scalar_lea.vmem %s1, %s201
        $region28: #{tpu_custom_call.1} parent=23 // pred_fallthru
          _
        // Predicated region
        $region29: #{tpu_custom_call.1} parent=23 // pred_check
          %p203 = pneg %p70
        $region30: #{tpu_custom_call.1} parent=23 // pred_check_branch
          %205 = sbr.rel (%p203) target = $region32
        $region31: #{tpu_custom_call.1} parent=23 // pred_region
          %p206 = scmp.lt.s32.totalorder %s24, 1
          %s207 = scalar_select %p206, %s24, 1
          %s208 = smul.addr %s207, 2
          %s209 = scalar_lea.vmem %s2, %s208
        $region32: #{tpu_custom_call.1} parent=23 // pred_fallthru
          _
      $region24: #{tpu_custom_call.1} parent=5 // pred_fallthru
        _
      %p210 = scmp.le.s32.totalorder 1, %s24
      %p211 = scmp.lt.s32.totalorder %s24, 3
      %p212 = pnand %p210, %p211
      %p213 = pneg %p212
      // Predicated region
      $region33: #{tpu_custom_call.1} parent=5 // pred_check
        _
      $region34: #{tpu_custom_call.1} parent=5 // pred_check_branch
        %215 = sbr.rel (%p212) target = $region36
      $region35: #{tpu_custom_call.1} parent=5 // pred_region
        %s216 = ssub.s32 %s24, 1
        %p217 = scmp.lt.s32.totalorder %s29, 1
        %s218 = scalar_select %p217, %s29, 1
        %s219 = smul.addr %s218, 14
        %s220 = smul.addr %s219, 8
        %s221 = scalar_lea.vmem %s1, %s220
        %p222 = pneg %p50
        %p223 = pneg %p47
        %p224 = scmp.lt.s32.totalorder %s29, 1
        %s225 = scalar_select %p224, %s29, 1
        %s226 = smul.addr %s225, 2
        %s227 = scalar_lea.vmem %s2, %s226
        %p228 = pneg %p76
        %p229 = pneg %p73
        %p230 = pneg %p97
        %p231 = pneg %p94
        %p232 = pneg %p118
        %p233 = pneg %p115
        %p234 = pneg %p144
        %p235 = pneg %p141
        %p236 = scmp.lt.s32.totalorder %s29, 1
        %s237 = scalar_select %p236, %s29, 1
        %s238 = scalar_lea.vmem %s5, %s237
        %p239 = pneg %p170
        %p240 = pneg %p167
        %s241 = sand.u32 %s157, 1
        %s242 = scalar_lea.sflag [#allocation5], %s241
        %s243 = sand.u32 %s157, 1
        %s244 = smul.addr %s243, 2
        %s245 = scalar_lea.vmem [#allocation4], %s244
        %p246 = scmp.lt.s32.totalorder %s29, 1
        %s247 = scalar_select %p246, %s29, 1
        %s248 = smul.addr %s247, 14
        %s249 = smul.addr %s248, 8
        %s250 = scalar_lea.vmem %s1, %s249
        %p251 = scmp.lt.s32.totalorder %s29, 1
        %s252 = scalar_select %p251, %s29, 1
        %s253 = smul.addr %s252, 2
        %s254 = scalar_lea.vmem %s2, %s253
        %p255 = scmp.lt.s32.totalorder %s29, 1
        %s256 = scalar_select %p255, %s29, 1
        %s257 = scalar_lea.vmem %s5, %s256
        %v260 = vld [vmem:[%s250] sm:$0xff]
        %v261 = vld [vmem:[%s250 + $0x8] sm:$0xff]
        %v262 = vld [vmem:[%s250 + $0x10] sm:$0xff]
        %v263 = vld [vmem:[%s250 + $0x18] sm:$0xff]
        %v264 = vld [vmem:[%s250 + $0x20] sm:$0xff]
        %v265 = vld [vmem:[%s250 + $0x28] sm:$0xff]
        %v266 = vld [vmem:[%s250 + $0x30] sm:$0xff]
        %v267 = vld [vmem:[%s250 + $0x38] sm:$0xff]
        %v268 = vld [vmem:[%s250 + $0x40] sm:$0xff]
        %v269 = vld [vmem:[%s250 + $0x48] sm:$0xff]
        %v270 = vld [vmem:[%s250 + $0x50] sm:$0xff]
        %v271 = vld [vmem:[%s250 + $0x58] sm:$0xff]
        %v272 = vld [vmem:[%s250 + $0x60] sm:$0x3]
        %v273 = vld [vmem:[%s250 + $0x68] sm:$0x3]
        %v274 = vld [vmem:[%s254] sm:$0x3]
        %v275 = vld [vmem:[%s3] sm:$0xff]
        %v276 = vld [vmem:[%s3 + $0x8] sm:$0xff]
        %v277 = vld [vmem:[%s3 + $0x10] sm:$0xff]
        %v278 = vld [vmem:[%s3 + $0x18] sm:$0xff]
        %v279 = vld [vmem:[%s3 + $0x20] sm:$0xff]
        %v280 = vld [vmem:[%s3 + $0x28] sm:$0xff]
        %v281 = vld [vmem:[%s3 + $0x30] sm:$0x3]
        %v282 = vld [vmem:[%s4] sm:$0xff]
        %v283 = vld [vmem:[%s4 + $0x8] sm:$0xff]
        %v284 = vld [vmem:[%s4 + $0x10] sm:$0xff]
        %v285 = vld [vmem:[%s4 + $0x18] sm:$0xff]
        %v286 = vld [vmem:[%s4 + $0x20] sm:$0xff]
        %v287 = vld [vmem:[%s4 + $0x28] sm:$0xff]
        %v288 = vld [vmem:[%s4 + $0x30] sm:$0x3]
        %s289 = sld [smem:[#allocation3 + %s29]]
        %v290 = vstv %s289
        %vm291 = vcmp.eq.s32.totalorder %v275, %v290
        %vm292 = vcmp.eq.s32.totalorder %v276, %v290
        %vm293 = vcmp.eq.s32.totalorder %v277, %v290
        %vm294 = vcmp.eq.s32.totalorder %v278, %v290
        %vm295 = vcmp.eq.s32.totalorder %v279, %v290
        %vm296 = vcmp.eq.s32.totalorder %v280, %v290
        %vm297 = vcmp.eq.s32.totalorder %v281, %v290
        %v298 = vsel %vm291, %v282, 0.0
        %v299 = vsel %vm292, %v283, 0.0
        %v300 = vsel %vm293, %v284, 0.0
        %v301 = vsel %vm294, %v285, 0.0
        %v302 = vsel %vm295, %v286, 0.0
        %v303 = vsel %vm296, %v287, 0.0
        %v304 = vsel %vm297, %v288, 0.0
        %vm305 = vcmp.gt.f32.partialorder %v298, 0.0
        %vm306 = vcmp.gt.f32.partialorder %v299, 0.0
        %vm307 = vcmp.gt.f32.partialorder %v300, 0.0
        %vm308 = vcmp.gt.f32.partialorder %v301, 0.0
        %vm309 = vcmp.gt.f32.partialorder %v302, 0.0
        %vm310 = vcmp.gt.f32.partialorder %v303, 0.0
        %vm311 = vcmp.gt.f32.partialorder %v304, 0.0
        %v312 = vlaneseq
        %v313 = vshrl.u32 %v312, 7
        %v314 = vadd.s32 %v313, 8
        %v315 = vadd.s32 %v313, 16
        %v316 = vadd.s32 %v313, 24
        %v317 = vadd.s32 %v313, 32
        %v318 = vadd.s32 %v313, 40
        %v319 = vadd.s32 %v313, 48
        %v320 = vsel %vm305, 1, 0
        %v321 = vsel %vm306, 1, 0
        %v322 = vsel %vm307, 1, 0
        %v323 = vsel %vm308, 1, 0
        %v324 = vsel %vm309, 1, 0
        %v325 = vsel %vm310, 1, 0
        %v326 = vsel %vm311, 1, 0
        %327 = vset.pattern.permute.xlu0 0
        %328 = vperm.xlu0 %327, %v320
        %v329 = vpop.permute.xlu0 %328
        %330 = vset.pattern.permute.xlu0 0
        %331 = vperm.xlu0 %330, %v321
        %v332 = vpop.permute.xlu0 %331
        %333 = vset.pattern.permute.xlu0 0
        %334 = vperm.xlu0 %333, %v322
        %v335 = vpop.permute.xlu0 %334
        %336 = vset.pattern.permute.xlu0 0
        %337 = vperm.xlu0 %336, %v323
        %v338 = vpop.permute.xlu0 %337
        %339 = vset.pattern.permute.xlu0 0
        %340 = vperm.xlu0 %339, %v324
        %v341 = vpop.permute.xlu0 %340
        %342 = vset.pattern.permute.xlu0 0
        %343 = vperm.xlu0 %342, %v325
        %v344 = vpop.permute.xlu0 %343
        %345 = vset.pattern.permute.xlu0 0
        %346 = vperm.xlu0 %345, %v326
        %v347 = vpop.permute.xlu0 %346
        %vm348 = vcmp.eq.s32.totalorder %v329, 1
        %vm349 = vcmp.eq.s32.totalorder %v332, 1
        %vm350 = vcmp.eq.s32.totalorder %v335, 1
        %vm351 = vcmp.eq.s32.totalorder %v338, 1
        %vm352 = vcmp.eq.s32.totalorder %v341, 1
        %vm353 = vcmp.eq.s32.totalorder %v344, 1
        %vm354 = vcmp.eq.s32.totalorder %v347, 1
        %v355 = vsel %vm348, %v260, -inf
        %v356 = vsel %vm348, %v261, -inf
        %v357 = vsel %vm349, %v262, -inf
        %v358 = vsel %vm349, %v263, -inf
        %v359 = vsel %vm350, %v264, -inf
        %v360 = vsel %vm350, %v265, -inf
        %v361 = vsel %vm351, %v266, -inf
        %v362 = vsel %vm351, %v267, -inf
        %v363 = vsel %vm352, %v268, -inf
        %v364 = vsel %vm352, %v269, -inf
        %v365 = vsel %vm353, %v270, -inf
        %v366 = vsel %vm353, %v271, -inf
        %v367 = vsel %vm354, %v272, -inf
        %v368 = vsel %vm354, %v273, -inf
        %v369 = vmax.f32 %v355, %v359
        %v370 = vmax.f32 %v357, %v361
        %v371 = vmax.f32 %v369, %v363
        %v372 = vmax.f32 %v370, %v365
        %vm373 = vcmask 1041408
        %v374 = vsel %vm373, %v367, -inf
        %v375 = vmax.f32 %v371, %v374
        %v376 = vmax.f32 %v375, %v372
        %v377 = vrot.slane %v376, 4
        %v378 = vmax.f32 %v376, %v377
        %v379 = vrot.slane %v378, 2
        %v380 = vmax.f32 %v378, %v379
        %v381 = vrot.slane %v380, 1
        %v382 = vmax.f32 %v380, %v381
        %vm383 = vcmask 588800
        %v384 = vsel %vm383, %v356, -inf
        %v385 = vsel %vm383, %v358, -inf
        %v386 = vsel %vm383, %v360, -inf
        %v387 = vmax.f32 %v384, %v386
        %v388 = vsel %vm383, %v362, -inf
        %v389 = vmax.f32 %v385, %v388
        %v390 = vsel %vm383, %v364, -inf
        %v391 = vmax.f32 %v387, %v390
        %v392 = vsel %vm383, %v366, -inf
        %v393 = vmax.f32 %v389, %v392
        %vm394 = vcmask 582656
        %v395 = vsel %vm394, %v368, -inf
        %v396 = vmax.f32 %v391, %v395
        %v397 = vmax.f32 %v396, %v393
        %v398 = vrot.slane %v397, 4
        %v399 = vmax.f32 %v397, %v398
        %v400 = vrot.slane %v399, 2
        %v401 = vmax.f32 %v399, %v400
        %v402 = vrot.slane %v401, 1
        %v403 = vmax.f32 %v401, %v402
        %vm404 = vcmp.eq.f32.partialorder %v355, %v382
        %vm405 = vcmp.eq.f32.partialorder %v356, %v403
        %vm406 = vcmp.eq.f32.partialorder %v357, %v382
        %vm407 = vcmp.eq.f32.partialorder %v358, %v403
        %vm408 = vcmp.eq.f32.partialorder %v359, %v382
        %vm409 = vcmp.eq.f32.partialorder %v360, %v403
        %vm410 = vcmp.eq.f32.partialorder %v361, %v382
        %vm411 = vcmp.eq.f32.partialorder %v362, %v403
        %vm412 = vcmp.eq.f32.partialorder %v363, %v382
        %vm413 = vcmp.eq.f32.partialorder %v364, %v403
        %vm414 = vcmp.eq.f32.partialorder %v365, %v382
        %vm415 = vcmp.eq.f32.partialorder %v366, %v403
        %vm416 = vcmp.eq.f32.partialorder %v367, %v382
        %vm417 = vcmp.eq.f32.partialorder %v368, %v403
        %v418 = vsel %vm404, %v313, 50
        %v419 = vsel %vm405, %v313, 50
        %v420 = vsel %vm406, %v314, 50
        %v421 = vsel %vm407, %v314, 50
        %v422 = vsel %vm408, %v315, 50
        %v423 = vsel %vm409, %v315, 50
        %v424 = vsel %vm410, %v316, 50
        %v425 = vsel %vm411, %v316, 50
        %v426 = vsel %vm412, %v317, 50
        %v427 = vsel %vm413, %v317, 50
        %v428 = vsel %vm414, %v318, 50
        %v429 = vsel %vm415, %v318, 50
        %v430 = vsel %vm416, %v319, 50
        %v431 = vsel %vm417, %v319, 50
        %vm432 = vcmp.lt.s32.totalorder %v418, %v422
        %v433 = vsel %vm432, %v418, %v422
        %vm434 = vcmp.lt.s32.totalorder %v420, %v424
        %v435 = vsel %vm434, %v420, %v424
        %vm436 = vcmp.lt.s32.totalorder %v433, %v426
        %v437 = vsel %vm436, %v433, %v426
        %vm438 = vcmp.lt.s32.totalorder %v435, %v428
        %v439 = vsel %vm438, %v435, %v428
        %v440 = vsel %vm373, %v430, 2147483647
        %vm441 = vcmp.lt.s32.totalorder %v437, %v440
        %v442 = vsel %vm441, %v437, %v440
        %vm443 = vcmp.lt.s32.totalorder %v442, %v439
        %v444 = vsel %vm443, %v442, %v439
        %v445 = vrot.slane %v444, 4
        %vm446 = vcmp.lt.s32.totalorder %v444, %v445
        %v447 = vsel %vm446, %v444, %v445
        %v448 = vrot.slane %v447, 2
        %vm449 = vcmp.lt.s32.totalorder %v447, %v448
        %v450 = vsel %vm449, %v447, %v448
        %v451 = vrot.slane %v450, 1
        %vm452 = vcmp.lt.s32.totalorder %v450, %v451
        %v453 = vsel %vm452, %v450, %v451
        %v454 = vsel %vm383, %v419, 2147483647
        %v455 = vsel %vm383, %v421, 2147483647
        %v456 = vsel %vm383, %v423, 2147483647
        %vm457 = vcmp.lt.s32.totalorder %v454, %v456
        %v458 = vsel %vm457, %v454, %v456
        %v459 = vsel %vm383, %v425, 2147483647
        %vm460 = vcmp.lt.s32.totalorder %v455, %v459
        %v461 = vsel %vm460, %v455, %v459
        %v462 = vsel %vm383, %v427, 2147483647
        %vm463 = vcmp.lt.s32.totalorder %v458, %v462
        %v464 = vsel %vm463, %v458, %v462
        %v465 = vsel %vm383, %v429, 2147483647
        %vm466 = vcmp.lt.s32.totalorder %v461, %v465
        %v467 = vsel %vm466, %v461, %v465
        %v468 = vsel %vm394, %v431, 2147483647
        %vm469 = vcmp.lt.s32.totalorder %v464, %v468
        %v470 = vsel %vm469, %v464, %v468
        %vm471 = vcmp.lt.s32.totalorder %v470, %v467
        %v472 = vsel %vm471, %v470, %v467
        %v473 = vrot.slane %v472, 4
        %vm474 = vcmp.lt.s32.totalorder %v472, %v473
        %v475 = vsel %vm474, %v472, %v473
        %v476 = vrot.slane %v475, 2
        %vm477 = vcmp.lt.s32.totalorder %v475, %v476
        %v478 = vsel %vm477, %v475, %v476
        %v479 = vrot.slane %v478, 1
        %vm480 = vcmp.lt.s32.totalorder %v478, %v479
        %v481 = vsel %vm480, %v478, %v479
        %v482 = vrot.slane %v481, 7
        %vm483 = vcmask 1040384
        %v484 = vsel %vm483, %v453, %v482
        %v485 = vlaneseq
        %vm486 = vcmp.ge.s32.totalorder %v485, 0
        %vm487 = vcmp.lt.s32.totalorder %v485, 200
        %vm488 = vmand %vm486, %vm487
        %489 = vst.msk [vmem:[%s245] sm:$0x3] %vm488, %v484
        %vm490 = vcmp.eq.s32.totalorder %v453, %v313
        %vm491 = vcmp.eq.s32.totalorder %v481, %v313
        %vm492 = vcmp.eq.s32.totalorder %v453, %v314
        %vm493 = vcmp.eq.s32.totalorder %v481, %v314
        %vm494 = vcmp.eq.s32.totalorder %v453, %v315
        %vm495 = vcmp.eq.s32.totalorder %v481, %v315
        %vm496 = vcmp.eq.s32.totalorder %v453, %v316
        %vm497 = vcmp.eq.s32.totalorder %v481, %v316
        %vm498 = vcmp.eq.s32.totalorder %v453, %v317
        %vm499 = vcmp.eq.s32.totalorder %v481, %v317
        %vm500 = vcmp.eq.s32.totalorder %v453, %v318
        %vm501 = vcmp.eq.s32.totalorder %v481, %v318
        %vm502 = vcmp.eq.s32.totalorder %v453, %v319
        %vm503 = vcmp.eq.s32.totalorder %v481, %v319
        %v504 = vperm.slane %v274, 0
        %v505 = vperm.slane %v274, 1
        %vm506 = vcmp.eq.s32.totalorder %v504, %v313
        %vm507 = vcmp.eq.s32.totalorder %v505, %v313
        %vm508 = vcmp.eq.s32.totalorder %v504, %v314
        %vm509 = vcmp.eq.s32.totalorder %v505, %v314
        %vm510 = vcmp.eq.s32.totalorder %v504, %v315
        %vm511 = vcmp.eq.s32.totalorder %v505, %v315
        %vm512 = vcmp.eq.s32.totalorder %v504, %v316
        %vm513 = vcmp.eq.s32.totalorder %v505, %v316
        %vm514 = vcmp.eq.s32.totalorder %v504, %v317
        %vm515 = vcmp.eq.s32.totalorder %v505, %v317
        %vm516 = vcmp.eq.s32.totalorder %v504, %v318
        %vm517 = vcmp.eq.s32.totalorder %v505, %v318
        %vm518 = vcmp.eq.s32.totalorder %v504, %v319
        %vm519 = vcmp.eq.s32.totalorder %v505, %v319
        %vm520 = vmand %vm490, %vm506
        %vm521 = vmand %vm491, %vm507
        %vm522 = vmand %vm492, %vm508
        %vm523 = vmand %vm493, %vm509
        %vm524 = vmand %vm494, %vm510
        %vm525 = vmand %vm495, %vm511
        %vm526 = vmand %vm496, %vm512
        %vm527 = vmand %vm497, %vm513
        %vm528 = vmand %vm498, %vm514
        %vm529 = vmand %vm499, %vm515
        %vm530 = vmand %vm500, %vm516
        %vm531 = vmand %vm501, %vm517
        %vm532 = vmand %vm502, %vm518
        %vm533 = vmand %vm503, %vm519
        %v534 = vsel %vm520, 1, 0
        %v535 = vsel %vm521, 1, 0
        %v536 = vsel %vm522, 1, 0
        %v537 = vsel %vm523, 1, 0
        %v538 = vsel %vm524, 1, 0
        %v539 = vsel %vm525, 1, 0
        %v540 = vsel %vm526, 1, 0
        %v541 = vsel %vm527, 1, 0
        %v542 = vsel %vm528, 1, 0
        %v543 = vsel %vm529, 1, 0
        %v544 = vsel %vm530, 1, 0
        %v545 = vsel %vm531, 1, 0
        %v546 = vsel %vm532, 1, 0
        %v547 = vsel %vm533, 1, 0
        %v548 = vcvt.s32.f32 %v534
        %v549 = vcvt.s32.f32 %v535
        %v550 = vcvt.s32.f32 %v536
        %v551 = vcvt.s32.f32 %v537
        %v552 = vcvt.s32.f32 %v538
        %v553 = vcvt.s32.f32 %v539
        %v554 = vcvt.s32.f32 %v540
        %v555 = vcvt.s32.f32 %v541
        %v556 = vcvt.s32.f32 %v542
        %v557 = vcvt.s32.f32 %v543
        %v558 = vcvt.s32.f32 %v544
        %v559 = vcvt.s32.f32 %v545
        %v560 = vcvt.s32.f32 %v546
        %v561 = vcvt.s32.f32 %v547
        %v562 = vpack.c.bf16 %v549, %v548
        %v563 = vpack.c.bf16 %v551, %v550
        %v564 = vpack.c.bf16 %v553, %v552
        %v565 = vpack.c.bf16 %v555, %v554
        %v566 = vpack.c.bf16 %v557, %v556
        %v567 = vpack.c.bf16 %v559, %v558
        %v568 = vpack.c.bf16 %v561, %v560
        %v569 = vsel %vm490, 1, 0
        %v570 = vsel %vm491, 1, 0
        %v571 = vsel %vm492, 1, 0
        %v572 = vsel %vm493, 1, 0
        %v573 = vsel %vm494, 1, 0
        %v574 = vsel %vm495, 1, 0
        %v575 = vsel %vm496, 1, 0
        %v576 = vsel %vm497, 1, 0
        %v577 = vsel %vm498, 1, 0
        %v578 = vsel %vm499, 1, 0
        %v579 = vsel %vm500, 1, 0
        %v580 = vsel %vm501, 1, 0
        %v581 = vsel %vm502, 1, 0
        %v582 = vsel %vm503, 1, 0
        %v583 = vcvt.s32.f32 %v569
        %v584 = vcvt.s32.f32 %v570
        %v585 = vcvt.s32.f32 %v571
        %v586 = vcvt.s32.f32 %v572
        %v587 = vcvt.s32.f32 %v573
        %v588 = vcvt.s32.f32 %v574
        %v589 = vcvt.s32.f32 %v575
        %v590 = vcvt.s32.f32 %v576
        %v591 = vcvt.s32.f32 %v577
        %v592 = vcvt.s32.f32 %v578
        %v593 = vcvt.s32.f32 %v579
        %v594 = vcvt.s32.f32 %v580
        %v595 = vcvt.s32.f32 %v581
        %v596 = vcvt.s32.f32 %v582
        %v597 = vpack.c.bf16 %v584, %v583
        %v598 = vpack.c.bf16 %v586, %v585
        %v599 = vpack.c.bf16 %v588, %v587
        %v600 = vpack.c.bf16 %v590, %v589
        %v601 = vpack.c.bf16 %v592, %v591
        %v602 = vpack.c.bf16 %v594, %v593
        %v603 = vpack.c.bf16 %v596, %v595
        %v604 = vsel %vm506, 1, 0
        %v605 = vsel %vm507, 1, 0
        %v606 = vsel %vm508, 1, 0
        %v607 = vsel %vm509, 1, 0
        %v608 = vsel %vm510, 1, 0
        %v609 = vsel %vm511, 1, 0
        %v610 = vsel %vm512, 1, 0
        %v611 = vsel %vm513, 1, 0
        %v612 = vsel %vm514, 1, 0
        %v613 = vsel %vm515, 1, 0
        %v614 = vsel %vm516, 1, 0
        %v615 = vsel %vm517, 1, 0
        %v616 = vsel %vm518, 1, 0
        %v617 = vsel %vm519, 1, 0
        %v618 = vcvt.s32.f32 %v604
        %v619 = vcvt.s32.f32 %v605
        %v620 = vcvt.s32.f32 %v606
        %v621 = vcvt.s32.f32 %v607
        %v622 = vcvt.s32.f32 %v608
        %v623 = vcvt.s32.f32 %v609
        %v624 = vcvt.s32.f32 %v610
        %v625 = vcvt.s32.f32 %v611
        %v626 = vcvt.s32.f32 %v612
        %v627 = vcvt.s32.f32 %v613
        %v628 = vcvt.s32.f32 %v614
        %v629 = vcvt.s32.f32 %v615
        %v630 = vcvt.s32.f32 %v616
        %v631 = vcvt.s32.f32 %v617
        %v632 = vpack.c.bf16 %v619, %v618
        %v633 = vpack.c.bf16 %v621, %v620
        %v634 = vpack.c.bf16 %v623, %v622
        %v635 = vpack.c.bf16 %v625, %v624
        %v636 = vpack.c.bf16 %v627, %v626
        %v637 = vpack.c.bf16 %v629, %v628
        %v638 = vpack.c.bf16 %v631, %v630
        %v639 = vunpack.c.l.bf16 %v597
        %v640 = vunpack.c.h.bf16 %v597
        %v641 = vunpack.c.l.bf16 %v598
        %v642 = vunpack.c.h.bf16 %v598
        %v643 = vunpack.c.l.bf16 %v599
        %v644 = vunpack.c.h.bf16 %v599
        %v645 = vunpack.c.l.bf16 %v600
        %v646 = vunpack.c.h.bf16 %v600
        %v647 = vunpack.c.l.bf16 %v601
        %v648 = vunpack.c.h.bf16 %v601
        %v649 = vunpack.c.l.bf16 %v602
        %v650 = vunpack.c.h.bf16 %v602
        %v651 = vunpack.c.l.bf16 %v603
        %v652 = vunpack.c.h.bf16 %v603
        %v653 = vunpack.c.l.bf16 %v632
        %v654 = vunpack.c.h.bf16 %v632
        %v655 = vunpack.c.l.bf16 %v633
        %v656 = vunpack.c.h.bf16 %v633
        %v657 = vunpack.c.l.bf16 %v634
        %v658 = vunpack.c.h.bf16 %v634
        %v659 = vunpack.c.l.bf16 %v635
        %v660 = vunpack.c.h.bf16 %v635
        %v661 = vunpack.c.l.bf16 %v636
        %v662 = vunpack.c.h.bf16 %v636
        %v663 = vunpack.c.l.bf16 %v637
        %v664 = vunpack.c.h.bf16 %v637
        %v665 = vunpack.c.l.bf16 %v638
        %v666 = vunpack.c.h.bf16 %v638
        %v667 = vadd.f32 %v639, %v653
        %v668 = vadd.f32 %v640, %v654
        %v669 = vadd.f32 %v641, %v655
        %v670 = vadd.f32 %v642, %v656
        %v671 = vadd.f32 %v643, %v657
        %v672 = vadd.f32 %v644, %v658
        %v673 = vadd.f32 %v645, %v659
        %v674 = vadd.f32 %v646, %v660
        %v675 = vadd.f32 %v647, %v661
        %v676 = vadd.f32 %v648, %v662
        %v677 = vadd.f32 %v649, %v663
        %v678 = vadd.f32 %v650, %v664
        %v679 = vadd.f32 %v651, %v665
        %v680 = vadd.f32 %v652, %v666
        %v681 = vpack.c.bf16 %v668, %v667
        %v682 = vpack.c.bf16 %v670, %v669
        %v683 = vpack.c.bf16 %v672, %v671
        %v684 = vpack.c.bf16 %v674, %v673
        %v685 = vpack.c.bf16 %v676, %v675
        %v686 = vpack.c.bf16 %v678, %v677
        %v687 = vpack.c.bf16 %v680, %v679
        %v695 = vunpack.c.l.b16 %v562
        %v696 = vunpack.c.h.b16 %v562
        %v697 = vunpack.c.l.b16 %v563
        %v698 = vunpack.c.h.b16 %v563
        %v699 = vunpack.c.l.b16 %v564
        %v700 = vunpack.c.h.b16 %v564
        %v701 = vunpack.c.l.b16 %v565
        %v702 = vunpack.c.h.b16 %v565
        %v703 = vunpack.c.l.b16 %v566
        %v704 = vunpack.c.h.b16 %v566
        %v705 = vunpack.c.l.b16 %v567
        %v706 = vunpack.c.h.b16 %v567
        %v707 = vunpack.c.l.b16 %v568
        %v708 = vunpack.c.h.b16 %v568
        %v709 = vpack.c.b16 %v697, %v695
        %v710 = vpack.c.b16 %v698, %v696
        %v711 = vpack.c.b16 %v701, %v699
        %v712 = vpack.c.b16 %v702, %v700
        %v713 = vpack.c.b16 %v705, %v703
        %v714 = vpack.c.b16 %v706, %v704
        %v715 = vpack.c.b16 %v707, %v707
        %v716 = vpack.c.b16 %v708, %v708
        %v722 = vsel %vm383, %v710, 0
        %v725 = vsel %vm383, %v712, 0
        %v728 = vsel %vm383, %v714, 0
        %v731 = vsel %vm383, %v716, 0
        %vm733 = vcmask 1043456
        %v735 = vsel %vm733, 1065369472, 0
        %737 = vmatpush.bf16.msra.mxu0 1065369472
        %738 = vmatpush.bf16.msra.mxu0 1065369472
        %739 = vmatpush.bf16.msra.mxu0 1065369472
        %740 = vmatpush.bf16.msra.mxu0 1065369472
        %741 = vmatpush.bf16.msra.mxu0 1065369472
        %742 = vmatpush.bf16.msra.mxu0 1065369472
        %743 = vmatpush.bf16.msra.mxu0 1065369472
        %744 = vmatpush.bf16.msra.mxu0 1065369472
        %745 = vmatmul.bf16.gmra.mxu0 %v709
        %v746 = vpop.f32.mrf.mxu0
        %v747 = vadd.f32 0.0, %v746
        %v748 = vpop.f32.mrf.mxu0
        %v749 = vadd.f32 0.0, %v748
        %750 = vmatmul.bf16.gmra.mxu0 %v711
        %v751 = vpop.f32.mrf.mxu0
        %v752 = vadd.f32 0.0, %v751
        %v753 = vpop.f32.mrf.mxu0
        %v754 = vadd.f32 0.0, %v753
        %755 = vmatmul.bf16.gmra.mxu0 %v713
        %v756 = vpop.f32.mrf.mxu0
        %v757 = vadd.f32 0.0, %v756
        %v758 = vpop.f32.mrf.mxu0
        %v759 = vadd.f32 0.0, %v758
        %760 = vmatmul.bf16.gmra.mxu0 %v715
        %v761 = vpop.f32.mrf.mxu0
        %v762 = vadd.f32 0.0, %v761
        %v763 = vpop.f32.mrf.mxu0
        %764 = vdwg.mxu0
        %765 = vmatpush.bf16.msra.mxu0 0
        %766 = vmatpush.bf16.msra.mxu0 0
        %767 = vmatpush.bf16.msra.mxu0 0
        %768 = vmatpush.bf16.msra.mxu0 %v735
        %769 = vmatpush.bf16.msra.mxu0 1065369472
        %770 = vmatpush.bf16.msra.mxu0 1065369472
        %771 = vmatpush.bf16.msra.mxu0 1065369472
        %772 = vmatpush.bf16.msra.mxu0 1065369472
        %773 = vmatmul.bf16.gmra.mxu0 %v722
        %v774 = vpop.f32.mrf.mxu0
        %v775 = vadd.f32 %v747, %v774
        %v776 = vpop.f32.mrf.mxu0
        %v777 = vadd.f32 %v749, %v776
        %778 = vmatmul.bf16.gmra.mxu0 %v725
        %v779 = vpop.f32.mrf.mxu0
        %v780 = vadd.f32 %v752, %v779
        %v781 = vpop.f32.mrf.mxu0
        %v782 = vadd.f32 %v754, %v781
        %783 = vmatmul.bf16.gmra.mxu0 %v728
        %v784 = vpop.f32.mrf.mxu0
        %v785 = vadd.f32 %v757, %v784
        %v786 = vpop.f32.mrf.mxu0
        %v787 = vadd.f32 %v759, %v786
        %788 = vmatmul.bf16.gmra.mxu0 %v731
        %v789 = vpop.f32.mrf.mxu0
        %v790 = vadd.f32 %v762, %v789
        %v791 = vpop.f32.mrf.mxu0
        %792 = vdwg.mxu0
        %v800 = vunpack.c.l.b16 %v681
        %v801 = vunpack.c.h.b16 %v681
        %v802 = vunpack.c.l.b16 %v682
        %v803 = vunpack.c.h.b16 %v682
        %v804 = vunpack.c.l.b16 %v683
        %v805 = vunpack.c.h.b16 %v683
        %v806 = vunpack.c.l.b16 %v684
        %v807 = vunpack.c.h.b16 %v684
        %v808 = vunpack.c.l.b16 %v685
        %v809 = vunpack.c.h.b16 %v685
        %v810 = vunpack.c.l.b16 %v686
        %v811 = vunpack.c.h.b16 %v686
        %v812 = vunpack.c.l.b16 %v687
        %v813 = vunpack.c.h.b16 %v687
        %v814 = vpack.c.b16 %v802, %v800
        %v815 = vpack.c.b16 %v803, %v801
        %v816 = vpack.c.b16 %v806, %v804
        %v817 = vpack.c.b16 %v807, %v805
        %v818 = vpack.c.b16 %v810, %v808
        %v819 = vpack.c.b16 %v811, %v809
        %v820 = vpack.c.b16 %v812, %v812
        %v821 = vpack.c.b16 %v813, %v813
        %v827 = vsel %vm383, %v815, 0
        %v830 = vsel %vm383, %v817, 0
        %v833 = vsel %vm383, %v819, 0
        %v836 = vsel %vm383, %v821, 0
        %838 = vmatpush.bf16.msra.mxu0 1065369472
        %839 = vmatpush.bf16.msra.mxu0 1065369472
        %840 = vmatpush.bf16.msra.mxu0 1065369472
        %841 = vmatpush.bf16.msra.mxu0 1065369472
        %842 = vmatpush.bf16.msra.mxu0 1065369472
        %843 = vmatpush.bf16.msra.mxu0 1065369472
        %844 = vmatpush.bf16.msra.mxu0 1065369472
        %845 = vmatpush.bf16.msra.mxu0 1065369472
        %846 = vmatmul.bf16.gmra.mxu0 %v814
        %v847 = vpop.f32.mrf.mxu0
        %v848 = vadd.f32 0.0, %v847
        %v849 = vpop.f32.mrf.mxu0
        %v850 = vadd.f32 0.0, %v849
        %851 = vmatmul.bf16.gmra.mxu0 %v816
        %v852 = vpop.f32.mrf.mxu0
        %v853 = vadd.f32 0.0, %v852
        %v854 = vpop.f32.mrf.mxu0
        %v855 = vadd.f32 0.0, %v854
        %856 = vmatmul.bf16.gmra.mxu0 %v818
        %v857 = vpop.f32.mrf.mxu0
        %v858 = vadd.f32 0.0, %v857
        %v859 = vpop.f32.mrf.mxu0
        %v860 = vadd.f32 0.0, %v859
        %861 = vmatmul.bf16.gmra.mxu0 %v820
        %v862 = vpop.f32.mrf.mxu0
        %v863 = vadd.f32 0.0, %v862
        %v864 = vpop.f32.mrf.mxu0
        %865 = vdwg.mxu0
        %866 = vmatpush.bf16.msra.mxu0 0
        %867 = vmatpush.bf16.msra.mxu0 0
        %868 = vmatpush.bf16.msra.mxu0 0
        %869 = vmatpush.bf16.msra.mxu0 %v735
        %870 = vmatpush.bf16.msra.mxu0 1065369472
        %871 = vmatpush.bf16.msra.mxu0 1065369472
        %872 = vmatpush.bf16.msra.mxu0 1065369472
        %873 = vmatpush.bf16.msra.mxu0 1065369472
        %874 = vmatmul.bf16.gmra.mxu0 %v827
        %v875 = vpop.f32.mrf.mxu0
        %v876 = vadd.f32 %v848, %v875
        %v877 = vpop.f32.mrf.mxu0
        %v878 = vadd.f32 %v850, %v877
        %879 = vmatmul.bf16.gmra.mxu0 %v830
        %v880 = vpop.f32.mrf.mxu0
        %v881 = vadd.f32 %v853, %v880
        %v882 = vpop.f32.mrf.mxu0
        %v883 = vadd.f32 %v855, %v882
        %884 = vmatmul.bf16.gmra.mxu0 %v833
        %v885 = vpop.f32.mrf.mxu0
        %v886 = vadd.f32 %v858, %v885
        %v887 = vpop.f32.mrf.mxu0
        %v888 = vadd.f32 %v860, %v887
        %889 = vmatmul.bf16.gmra.mxu0 %v836
        %v890 = vpop.f32.mrf.mxu0
        %v891 = vadd.f32 %v863, %v890
        %v892 = vpop.f32.mrf.mxu0
        %893 = vdwg.mxu0
        %v894 = vsub.f32 %v876, %v775
        %v895 = vsub.f32 %v878, %v777
        %v896 = vsub.f32 %v881, %v780
        %v897 = vsub.f32 %v883, %v782
        %v898 = vsub.f32 %v886, %v785
        %v899 = vsub.f32 %v888, %v787
        %v900 = vsub.f32 %v891, %v790
        %vm901 = vcmp.eq.f32.partialorder %v894, 0.0
        %vm902 = vcmp.eq.f32.partialorder %v895, 0.0
        %vm903 = vcmp.eq.f32.partialorder %v896, 0.0
        %vm904 = vcmp.eq.f32.partialorder %v897, 0.0
        %vm905 = vcmp.eq.f32.partialorder %v898, 0.0
        %vm906 = vcmp.eq.f32.partialorder %v899, 0.0
        %vm907 = vcmp.eq.f32.partialorder %v900, 0.0
        %v908 = vmax.f32 %v894, 1.0
        %v909 = vmax.f32 %v895, 1.0
        %v910 = vmax.f32 %v896, 1.0
        %v911 = vmax.f32 %v897, 1.0
        %v912 = vmax.f32 %v898, 1.0
        %v913 = vmax.f32 %v899, 1.0
        %v914 = vmax.f32 %v900, 1.0
        %v915 = vrcp.pop %v908
        %v916 = vmul.f32 %v908, %v915
        %v917 = vsub.f32 1.0, %v916
        %v918 = vmul.f32 %v915, %v917
        %v919 = vadd.f32 %v915, %v918
        %vm920 = vweird.f32 %v908
        %vm921 = vweird.f32 %v915
        %vm922 = vmor %vm920, %vm921
        %v923 = vsel %vm922, %v915, %v919
        %v924 = vand.u32 2147483647, %v908
        %vm925 = vcmp.eq.f32.partialorder %v924, 8.507059e+37
        %v926 = vand.u32 %v908, 2147483648
        %v927 = vor.u32 1.1754944e-38, %v926
        %v928 = vsel %vm925, %v927, %v923
        %v929 = vmul.f32 %v775, %v928
        %v930 = vrcp.pop %v909
        %v931 = vmul.f32 %v909, %v930
        %v932 = vsub.f32 1.0, %v931
        %v933 = vmul.f32 %v930, %v932
        %v934 = vadd.f32 %v930, %v933
        %vm935 = vweird.f32 %v909
        %vm936 = vweird.f32 %v930
        %vm937 = vmor %vm935, %vm936
        %v938 = vsel %vm937, %v930, %v934
        %v939 = vand.u32 2147483647, %v909
        %vm940 = vcmp.eq.f32.partialorder %v939, 8.507059e+37
        %v941 = vand.u32 %v909, 2147483648
        %v942 = vor.u32 1.1754944e-38, %v941
        %v943 = vsel %vm940, %v942, %v938
        %v944 = vmul.f32 %v777, %v943
        %v945 = vrcp.pop %v910
        %v946 = vmul.f32 %v910, %v945
        %v947 = vsub.f32 1.0, %v946
        %v948 = vmul.f32 %v945, %v947
        %v949 = vadd.f32 %v945, %v948
        %vm950 = vweird.f32 %v910
        %vm951 = vweird.f32 %v945
        %vm952 = vmor %vm950, %vm951
        %v953 = vsel %vm952, %v945, %v949
        %v954 = vand.u32 2147483647, %v910
        %vm955 = vcmp.eq.f32.partialorder %v954, 8.507059e+37
        %v956 = vand.u32 %v910, 2147483648
        %v957 = vor.u32 1.1754944e-38, %v956
        %v958 = vsel %vm955, %v957, %v953
        %v959 = vmul.f32 %v780, %v958
        %v960 = vrcp.pop %v911
        %v961 = vmul.f32 %v911, %v960
        %v962 = vsub.f32 1.0, %v961
        %v963 = vmul.f32 %v960, %v962
        %v964 = vadd.f32 %v960, %v963
        %vm965 = vweird.f32 %v911
        %vm966 = vweird.f32 %v960
        %vm967 = vmor %vm965, %vm966
        %v968 = vsel %vm967, %v960, %v964
        %v969 = vand.u32 2147483647, %v911
        %vm970 = vcmp.eq.f32.partialorder %v969, 8.507059e+37
        %v971 = vand.u32 %v911, 2147483648
        %v972 = vor.u32 1.1754944e-38, %v971
        %v973 = vsel %vm970, %v972, %v968
        %v974 = vmul.f32 %v782, %v973
        %v975 = vrcp.pop %v912
        %v976 = vmul.f32 %v912, %v975
        %v977 = vsub.f32 1.0, %v976
        %v978 = vmul.f32 %v975, %v977
        %v979 = vadd.f32 %v975, %v978
        %vm980 = vweird.f32 %v912
        %vm981 = vweird.f32 %v975
        %vm982 = vmor %vm980, %vm981
        %v983 = vsel %vm982, %v975, %v979
        %v984 = vand.u32 2147483647, %v912
        %vm985 = vcmp.eq.f32.partialorder %v984, 8.507059e+37
        %v986 = vand.u32 %v912, 2147483648
        %v987 = vor.u32 1.1754944e-38, %v986
        %v988 = vsel %vm985, %v987, %v983
        %v989 = vmul.f32 %v785, %v988
        %v990 = vrcp.pop %v913
        %v991 = vmul.f32 %v913, %v990
        %v992 = vsub.f32 1.0, %v991
        %v993 = vmul.f32 %v990, %v992
        %v994 = vadd.f32 %v990, %v993
        %vm995 = vweird.f32 %v913
        %vm996 = vweird.f32 %v990
        %vm997 = vmor %vm995, %vm996
        %v998 = vsel %vm997, %v990, %v994
        %v999 = vand.u32 2147483647, %v913
        %vm1000 = vcmp.eq.f32.partialorder %v999, 8.507059e+37
        %v1001 = vand.u32 %v913, 2147483648
        %v1002 = vor.u32 1.1754944e-38, %v1001
        %v1003 = vsel %vm1000, %v1002, %v998
        %v1004 = vmul.f32 %v787, %v1003
        %v1005 = vrcp.pop %v914
        %v1006 = vmul.f32 %v914, %v1005
        %v1007 = vsub.f32 1.0, %v1006
        %v1008 = vmul.f32 %v1005, %v1007
        %v1009 = vadd.f32 %v1005, %v1008
        %vm1010 = vweird.f32 %v914
        %vm1011 = vweird.f32 %v1005
        %vm1012 = vmor %vm1010, %vm1011
        %v1013 = vsel %vm1012, %v1005, %v1009
        %v1014 = vand.u32 2147483647, %v914
        %vm1015 = vcmp.eq.f32.partialorder %v1014, 8.507059e+37
        %v1016 = vand.u32 %v914, 2147483648
        %v1017 = vor.u32 1.1754944e-38, %v1016
        %v1018 = vsel %vm1015, %v1017, %v1013
        %v1019 = vmul.f32 %v790, %v1018
        %v1020 = vsel %vm901, 1.0, %v929
        %v1021 = vsel %vm902, 1.0, %v944
        %v1022 = vsel %vm903, 1.0, %v959
        %v1023 = vsel %vm904, 1.0, %v974
        %v1024 = vsel %vm905, 1.0, %v989
        %v1025 = vsel %vm906, 1.0, %v1004
        %v1026 = vsel %vm907, 1.0, %v1019
        %v1027 = vmul.f32 %v1020, %v298
        %v1028 = vmul.f32 %v1021, %v299
        %v1029 = vmul.f32 %v1022, %v300
        %v1030 = vmul.f32 %v1023, %v301
        %v1031 = vmul.f32 %v1024, %v302
        %v1032 = vmul.f32 %v1025, %v303
        %v1033 = vmul.f32 %v1026, %v304
        %vm1034 = vcmask 7168
        %v1035 = vsel %vm1034, %v1027, 0.0
        %v1036 = vsel %vm1034, %v1028, 0.0
        %v1037 = vadd.f32 %v1035, %v1036
        %v1038 = vsel %vm1034, %v1029, 0.0
        %v1039 = vadd.f32 %v1037, %v1038
        %v1040 = vsel %vm1034, %v1030, 0.0
        %v1041 = vadd.f32 %v1039, %v1040
        %v1042 = vsel %vm1034, %v1031, 0.0
        %v1043 = vadd.f32 %v1041, %v1042
        %v1044 = vsel %vm1034, %v1032, 0.0
        %v1045 = vadd.f32 %v1043, %v1044
        %vm1046 = vcmask 1024
        %v1047 = vsel %vm1046, %v1033, 0.0
        %v1048 = vadd.f32 %v1045, %v1047
        %v1049 = vrot.slane %v1048, 4
        %v1050 = vadd.f32 %v1048, %v1049
        %v1051 = vrot.slane %v1050, 2
        %v1052 = vadd.f32 %v1050, %v1051
        %v1053 = vrot.slane %v1052, 1
        %v1054 = vadd.f32 %v1052, %v1053
        %vm1055 = vcmask 0
        %1056 = vst.msk [vmem:[%s257] sm:$0x1] %vm1055, %v1054
        %p1057 = scmp.lt.s32.totalorder %s29, 1
        %s1058 = scalar_select %p1057, %s29, 1
        %s1059 = scalar_lea.vmem %s5, %s1058
        %s1060 = sand.u32 %s157, 1
        %s1061 = scalar_lea.sflag [#allocation5], %s1060
        %s1062 = sand.u32 %s157, 1
        %s1063 = smul.addr %s1062, 2
        %s1064 = scalar_lea.vmem [#allocation4], %s1063
        // Predicated region
        $region37: #{tpu_custom_call.1} parent=35 // pred_check
          %p1065 = pneg %p141
        $region38: #{tpu_custom_call.1} parent=35 // pred_check_branch
          %1067 = sbr.rel (%p1065) target = $region40
        $region39: #{tpu_custom_call.1} parent=35 // pred_region
          _
        $region40: #{tpu_custom_call.1} parent=35 // pred_fallthru
          _
        // Predicated region
        $region41: #{tpu_custom_call.1} parent=35 // pred_check
          %p1068 = pneg %p167
        $region42: #{tpu_custom_call.1} parent=35 // pred_check_branch
          %1070 = sbr.rel (%p1068) target = $region44
        $region43: #{tpu_custom_call.1} parent=35 // pred_region
          %1072 = vsyncadd %s1061, 0
          %s1073 = smul.addr %s29, 2
          %s1074 = scalar_lea.hbm %s6, %s1073
          %s1076 = sshll.u32 %s1064, 4
          %s1077 = int_to_ptr.vmem [resolvable:$true] %s1076
          %s1078 = sshll.u32 %s1074, 4
          %s1079 = int_to_ptr.hbm [resolvable:$true] %s1078
          %1081 = dma.vmem_to_hbm [thread:$0]  %s1077, 32, %s1079, %s1061
        $region44: #{tpu_custom_call.1} parent=35 // pred_fallthru
          _
      $region36: #{tpu_custom_call.1} parent=5 // pred_fallthru
        _
      %p1082 = scmp.le.s32.totalorder 2, %s24
      // Predicated region
      $region45: #{tpu_custom_call.1} parent=5 // pred_check
        %p1083 = pneg %p1082
      $region46: #{tpu_custom_call.1} parent=5 // pred_check_branch
        %1085 = sbr.rel (%p1083) target = $region48
      $region47: #{tpu_custom_call.1} parent=5 // pred_region
        %s1086 = ssub.s32 %s24, 2
        // Predicated region
        $region49: #{tpu_custom_call.1} parent=47 // pred_check
          %p1087 = pneg %p147
        $region50: #{tpu_custom_call.1} parent=47 // pred_check_branch
          %1089 = sbr.rel (%p1087) target = $region52
        $region51: #{tpu_custom_call.1} parent=47 // pred_region
          %p1090 = scmp.lt.s32.totalorder %s30, 1
          %s1091 = scalar_select %p1090, %s30, 1
          %s1092 = scalar_lea.vmem %s5, %s1091
        $region52: #{tpu_custom_call.1} parent=47 // pred_fallthru
          _
        // Predicated region
        $region53: #{tpu_custom_call.1} parent=47 // pred_check
          %p1093 = pneg %p173
        $region54: #{tpu_custom_call.1} parent=47 // pred_check_branch
          %1095 = sbr.rel (%p1093) target = $region56
        $region55: #{tpu_custom_call.1} parent=47 // pred_region
          %s1096 = sand.u32 %s158, 1
          %s1097 = scalar_lea.sflag [#allocation5], %s1096
          %s1098 = sand.u32 %s158, 1
          %s1099 = smul.addr %s1098, 2
          %s1100 = scalar_lea.vmem [#allocation4], %s1099
          %1102 = dma.done %s1097, 32
        $region56: #{tpu_custom_call.1} parent=47 // pred_fallthru
          _
      $region48: #{tpu_custom_call.1} parent=5 // pred_fallthru
        _
    $region6: #{tpu_custom_call.1} parent=1 // loop_footer
      %s28 = sadd.s32 1, %s24
    $region7: #{tpu_custom_call.1} parent=1 // loop_footer_branch
      %23 = sbr.rel target = $region3
    $region8: #{tpu_custom_call.1} parent=1 // loop_exit
      _
    %1103 = vsyncpa [#allocation5], 1
    %s1104 = scalar_lea.sflag [#allocation5], 1
    %1105 = vsyncpa %s1104, 1

</llo_original>
